<compile_context>
chip_gen: v5e
topology: v5e:2x2
jax: 0.10.0
libtpu: 0.0.40
codegen_flags: <defaults>
</compile_context>

<pallas_src>
import functools

import jax
import jax.numpy as jnp
from jax import lax
from jax.experimental import pallas as pl
from jax.experimental.pallas import tpu as pltpu


def _round_up(x, m):
    return (x + m - 1) // m * m


def gru_encode_kernel(gi_ref, whh_ref, bhhn_ref, out_ref, h_scratch, *, unroll):
    """GRU recurrence over one time chunk + final L2 normalization.

    gi_ref   : (TT, BB, Gp)   x @ W_ih + b_ih + [b_hh_r | b_hh_z | 0] (time-major)
    whh_ref  : (Hs, Gp)       hidden->gates weight, gate-aligned / padded
    bhhn_ref : (1, Hs) f32    n-gate hidden bias (must stay inside r*(...))
    out_ref  : (BB, H)        L2-normalized final hidden state
    h_scratch: (BB, Hs) f32   recurrent state carried across time chunks
    """
    ti = pl.program_id(1)
    nt = pl.num_programs(1)
    TT = gi_ref.shape[0]
    BB, Hs = h_scratch.shape
    H = out_ref.shape[1]

    # h0 = zeros (matches torch.zeros(depth, 1, size) initial state).
    @pl.when(ti == 0)
    def _():
        h_scratch[...] = jnp.zeros_like(h_scratch)

    # Hoisted out of the serial loop (grid-invariant operands).
    whh = whh_ref[...]            # (Hs, Gp)  bf16 or f32
    bhhn = bhhn_ref[...]          # (1, Hs)   f32

    def body(t, h):
        gi = gi_ref[t].astype(jnp.float32)                       # (BB, Gp)
        gh = jnp.dot(h.astype(whh.dtype), whh,
                     preferred_element_type=jnp.float32)         # (BB, Gp)
        # PyTorch GRU gate order [r, z, n]; one EUP sigmoid over the [r|z] slab.
        rz = jax.nn.sigmoid(gi[:, :2 * Hs] + gh[:, :2 * Hs])
        r = rz[:, :Hs]
        z = rz[:, Hs:]
        n = jnp.tanh(gi[:, 2 * Hs:3 * Hs] + r * (gh[:, 2 * Hs:3 * Hs] + bhhn))
        # (1-z)*n + z*h  ==  n + z*(h - n): one fewer VPU op on the serial path.
        return n + z * (h - n)

    # Hidden state lives in vregs for the whole chunk; VMEM scratch is touched
    # only once per time chunk.
    h = lax.fori_loop(0, TT, body, h_scratch[...], unroll=unroll)
    h_scratch[...] = h

    # F.normalize(h, p=2, dim=1) = h / max(||h||, 1e-12)
    #                            = h * rsqrt(max(sum(h^2), 1e-24)).
    @pl.when(ti == nt - 1)
    def _():
        sumsq = jnp.sum(h * h, axis=1, keepdims=True)            # padded lanes are 0
        inv = lax.rsqrt(jnp.maximum(sumsq, jnp.float32(1e-24)))
        out_ref[...] = (h * inv)[:, :H]


def _pad_gates(w, H, Hs, Gp):
    """(..., 3H) -> (..., Gp): gate g lives at [g*Hs : g*Hs+H], zeros elsewhere."""
    parts = []
    for g in range(3):
        blk = w[..., g * H:(g + 1) * H]
        if Hs > H:
            blk = jnp.pad(blk, [(0, 0)] * (blk.ndim - 1) + [(0, Hs - H)])
        parts.append(blk)
    out = jnp.concatenate(parts, axis=-1)
    if Gp > 3 * Hs:
        out = jnp.pad(out, [(0, 0)] * (out.ndim - 1) + [(0, Gp - 3 * Hs)])
    return out


def _default_batch_block(B):
    """Multiple of 8 dividing B, <= min(64, B//2): lets v7x shard the batch grid
    axis across both TensorCores and keeps the MXU M dim reasonably full."""
    if B <= 8 or B % 8 != 0:
        return B
    best = B
    for cand in range(8, min(64, B // 2) + 1, 8):
        if B % cand == 0:
            best = cand
    return best


def _vmem_limit_bytes():
    """~78% of physical VMEM: ~100 MiB on v5e/v6e (128 MiB), ~50 MiB on v7x (64 MiB)."""
    try:
        cap = int(pltpu.get_tpu_info().vmem_capacity_bytes)
    except Exception:
        cap = 64 * 1024 * 1024          # conservative (v7x per-core) fallback
    return max(16 * 1024 * 1024, int(cap * 0.78))


@functools.partial(jax.jit, static_argnames=("time_block", "batch_block", "precision"))
def audio_forward(speech2, w_ih_t, w_hh_t, b_ih, b_hh, *,
                  time_block=None, batch_block=None, precision="bf16"):
    """speech2: (B, T, F) f32 -> rep: (B, H) f32, L2-normalized rows.

    w_ih_t: (F, 3H), w_hh_t: (H, 3H), b_ih/b_hh: (1, 3H) (transposed PyTorch GRU
    params, gate order [r, z, n]).  precision="bf16" streams gi / W_hh in bf16
    (f32 accumulation + gate math); precision="f32" keeps everything f32.
    """
    assert precision in ("bf16", "f32")
    B, T, F = speech2.shape
    H = w_hh_t.shape[0]

    # Gate layout: pack all 3 gates into one 128-lane block when they fit,
    # otherwise pad each gate block to a 128-lane multiple.
    Hs = H if 3 * H <= 128 else _round_up(H, 128)
    Gp = _round_up(3 * Hs, 128)

    comp_dtype = jnp.bfloat16 if precision == "bf16" else jnp.float32
    gi_isize = 2 if precision == "bf16" else 4

    # ---- block sizing ----------------------------------------------------
    if batch_block is None:
        BB = _default_batch_block(B)
    else:
        BB = int(batch_block)
        assert B % BB == 0, "batch_block must divide B"
        assert BB == B or BB % 8 == 0, "batch_block must be a multiple of 8 (or == B)"

    vmem_limit = _vmem_limit_bytes()
    if time_block is None:
        # gi double-buffer gets at most ~half the per-generation VMEM budget.
        per_t = BB * Gp * gi_isize
        TT = max(1, min(T, 128, (vmem_limit // 2) // max(1, 2 * per_t)))
    else:
        TT = max(1, int(time_block))
    unroll = True if TT <= 16 else 8

    nt = -(-T // TT)
    T_pad = nt * TT
    nb = B // BB

    # ---- parameter prep (gate-aligned, padded, bias-folded) ---------------
    # Fold the r/z halves of b_hh into the hoisted projection; only the n-gate
    # hidden bias must stay inside r * (W_hn h + b_hn).
    b_fold = b_ih + jnp.concatenate(
        [b_hh[:, :2 * H], jnp.zeros((1, H), b_hh.dtype)], axis=-1)      # (1, 3H)
    b_fold_p = _pad_gates(b_fold.astype(jnp.float32), H, Hs, Gp)        # (1, Gp)
    bhh_n = b_hh[:, 2 * H:3 * H].astype(jnp.float32)                    # (1, H)
    if Hs > H:
        bhh_n = jnp.pad(bhh_n, ((0, 0), (0, Hs - H)))                   # (1, Hs)

    w_ih_p = _pad_gates(w_ih_t, H, Hs, Gp)                              # (F, Gp)
    w_hh_p = _pad_gates(w_hh_t, H, Hs, Gp)                              # (H, Gp)
    if Hs > H:
        w_hh_p = jnp.pad(w_hh_p, ((0, Hs - H), (0, 0)))                 # (Hs, Gp)
    w_hh_k = w_hh_p.astype(comp_dtype)

    # ---- hoisted input projection (time-major, no big-gi transpose) -------
    x_tm = jnp.transpose(speech2, (1, 0, 2))                            # (T, B, F)
    gi_all = jnp.einsum("tbf,fg->tbg", x_tm.astype(comp_dtype),
                        w_ih_p.astype(comp_dtype),
                        preferred_element_type=jnp.float32)
    gi_all = (gi_all + b_fold_p).astype(comp_dtype)                     # (T, B, Gp)

    # Pad T to a multiple of TT with exact-identity GRU steps:
    #   r -> sigmoid(-3e4) = 0, z -> sigmoid(+3e4) = 1, n -> tanh(0) = 0
    #   => h_new = n + z*(h - n) = h exactly.
    if T_pad > T:
        sat = jnp.float32(3.0e4)
        pad_step = jnp.concatenate(
            [jnp.full((1, 1, Hs), -sat, jnp.float32),
             jnp.full((1, 1, Hs), sat, jnp.float32),
             jnp.zeros((1, 1, Gp - 2 * Hs), jnp.float32)], axis=-1)
        pad_blk = jnp.broadcast_to(pad_step, (T_pad - T, B, Gp)).astype(comp_dtype)
        gi_all = jnp.concatenate([gi_all, pad_blk], axis=0)             # (T_pad, B, Gp)

    # TODO(synk): production batches padded to a fixed T need per-example length
    # handling (identity steps per row) for PyTorch packed-sequence parity.

    cost = pl.CostEstimate(
        flops=2 * T_pad * B * Hs * Gp + 12 * T_pad * B * 3 * Hs,
        transcendentals=3 * T_pad * B * Hs,
        bytes_accessed=(T_pad * B * Gp * gi_isize + nb * Hs * Gp * gi_isize
                        + Hs * 4 + B * H * 4),
    )

    rep = pl.pallas_call(
        functools.partial(gru_encode_kernel, unroll=unroll),
        out_shape=jax.ShapeDtypeStruct((B, H), jnp.float32),
        grid_spec=pltpu.PrefetchScalarGridSpec(
            num_scalar_prefetch=0,
            grid=(nb, nt),                       # (batch blocks, time chunks)
            in_specs=[
                pl.BlockSpec((TT, BB, Gp), lambda bi, ti: (ti, bi, 0)),
                # Grid-invariant weight/bias blocks (only DMA'd once; their
                # block index never changes).
                # TODO(synk): single-buffer these via pipeline_mode=pl.Buffered(1)
                # once that option is plumbed for the top-level TPU pipeline; for
                # the packed small-H layout they are tiny anyway.
                pl.BlockSpec((Hs, Gp), lambda bi, ti: (0, 0)),
                pl.BlockSpec((1, Hs), lambda bi, ti: (0, 0)),
            ],
            out_specs=pl.BlockSpec((BB, H), lambda bi, ti: (bi, 0)),
            scratch_shapes=[pltpu.VMEM((BB, Hs), jnp.float32)],
        ),
        compiler_params=pltpu.CompilerParams(
            dimension_semantics=("parallel", "arbitrary"),
            vmem_limit_bytes=vmem_limit,
        ),
        cost_estimate=cost,
    )(gi_all, w_hh_k, bhh_n)
    return rep


def reference_forward(speech2, w_ih_t, w_hh_t, b_ih, b_hh):
    """Pure-JAX reference (same math as torch GRU + F.normalize, lax.scan)."""
    B, T, F = speech2.shape
    H = w_hh_t.shape[0]
    h0 = jnp.zeros((B, H), jnp.float32)

    def step(h_prev, x_t):
        gi = x_t @ w_ih_t + b_ih
        gh = h_prev @ w_hh_t + b_hh
        r = jax.nn.sigmoid(gi[:, 0:H] + gh[:, 0:H])
        z = jax.nn.sigmoid(gi[:, H:2 * H] + gh[:, H:2 * H])
        n = jnp.tanh(gi[:, 2 * H:3 * H] + r * gh[:, 2 * H:3 * H])
        h_new = (1.0 - z) * n + z * h_prev
        return h_new, None

    h_last, _ = lax.scan(step, h0, jnp.transpose(speech2, (1, 0, 2)))
    norm = jnp.sqrt(jnp.sum(h_last * h_last, axis=1, keepdims=True))
    return h_last / jnp.maximum(norm, 1e-12)


def _make_inputs(key, B, T, F, H):
    k_x, k_wih, k_whh, k_bih, k_bhh = jax.random.split(key, 5)
    # Deterministic init mimicking PyTorch GRU: U(-1/sqrt(H), 1/sqrt(H)).
    bound = 1.0 / jnp.sqrt(jnp.float32(H))
    speech2 = jax.random.normal(k_x, (B, T, F), jnp.float32)   # (B, T, F) batch_first
    w_ih_t = jax.random.uniform(k_wih, (F, 3 * H), jnp.float32, -bound, bound)
    w_hh_t = jax.random.uniform(k_whh, (H, 3 * H), jnp.float32, -bound, bound)
    b_ih = jax.random.uniform(k_bih, (1, 3 * H), jnp.float32, -bound, bound)
    b_hh = jax.random.uniform(k_bhh, (1, 3 * H), jnp.float32, -bound, bound)
    return speech2, w_ih_t, w_hh_t, b_ih, b_hh


if __name__ == "__main__":
    key = jax.random.PRNGKey(0)
    k1, k2, k3 = jax.random.split(key, 3)

    # 1) Module-sized demo (size_feature=32, size=32, B=2, T=8), default bf16 path.
    args = _make_inputs(k1, B=2, T=8, F=32, H=32)
    rep = jax.block_until_ready(audio_forward(*args))
    ref = reference_forward(*args)
    assert rep.shape == (2, 32)
    assert jnp.all(jnp.isfinite(rep))
    assert jnp.allclose(rep, ref, atol=5e-2, rtol=5e-2)
    assert jnp.allclose(jnp.linalg.norm(rep, axis=1), 1.0, atol=1e-4)

    # 2) Same shapes, full f32 path (tight tolerance against the reference).
    rep32 = jax.block_until_ready(audio_forward(*args, precision="f32"))
    assert jnp.allclose(rep32, ref, atol=1e-4, rtol=1e-4)

    # 3) Multi-block grid: batch split into blocks of 8 (parallel axis) and an
    #    awkward T forcing time padding + the cross-chunk hidden-state carry.
    args3 = _make_inputs(k2, B=16, T=6, F=32, H=32)
    rep3 = jax.block_until_ready(
        audio_forward(*args3, time_block=4, batch_block=8, precision="f32"))
    ref3 = reference_forward(*args3)
    assert jnp.allclose(rep3, ref3, atol=1e-4, rtol=1e-4)

    # 4) Large-H layout branch (per-gate 128-lane padding, H not a lane multiple).
    args4 = _make_inputs(k3, B=2, T=4, F=16, H=48)
    rep4 = jax.block_until_ready(audio_forward(*args4, precision="f32"))
    ref4 = reference_forward(*args4)
    assert jnp.allclose(rep4, ref4, atol=1e-4, rtol=1e-4)

    print("KERNEL_OK")
</pallas_src>

<mosaic_0001>
module attributes {stable_mosaic.version = 11 : i64} {
  func.func @gru_encode_kernel(%arg0: i32, %arg1: i32, %arg2: memref<8x2x128xbf16, #tpu.memory_space<vmem>>, %arg3: memref<32x128xbf16, #tpu.memory_space<vmem>>, %arg4: memref<1x32xf32, #tpu.memory_space<vmem>>, %arg5: memref<2x32xf32, #tpu.memory_space<vmem>>, %arg6: memref<2x32xf32, #tpu.memory_space<vmem>>) attributes {dimension_semantics = [#tpu.dimension_semantics<parallel>, #tpu.dimension_semantics<arbitrary>], iteration_bounds = array<i64: 1, 1>, scalar_prefetch = 0 : i64, scratch_operands = 1 : i64, tpu.core_type = #tpu.core_type<tc>, window_params = [{transform_indices = @transform_0, window_bounds = array<i64: 8, 2, 128>}, {pipeline_mode = #tpu.pipeline_mode<synchronous>, transform_indices = @transform_1, window_bounds = array<i64: 32, 128>}, {pipeline_mode = #tpu.pipeline_mode<synchronous>, transform_indices = @transform_2, window_bounds = array<i64: 1, 32>}, {transform_indices = @transform_3, window_bounds = array<i64: 2, 32>}]} {
    %c0_i32 = arith.constant 0 : i32
    %0 = arith.cmpi eq, %arg1, %c0_i32 : i32
    %1 = arith.extui %0 : i1 to i32
    %c0_i32_0 = arith.constant 0 : i32
    %2 = arith.cmpi ne, %1, %c0_i32_0 : i32
    scf.if %2 {
      %cst_42 = arith.constant 0.000000e+00 : f32
      %218 = vector.broadcast %cst_42 : f32 to vector<2x32xf32>
      %c0_43 = arith.constant 0 : index
      %c0_44 = arith.constant 0 : index
      %219 = vector.load %arg6[%c0_43, %c0_44] : memref<2x32xf32, #tpu.memory_space<vmem>>, vector<2x32xf32>
      tpu.vector_store %arg6[%c0_43, %c0_44], %218 {strides = array<i32>} : memref<2x32xf32, #tpu.memory_space<vmem>>, vector<2x32xf32>,
    } else {
    }
    %c0 = arith.constant 0 : index
    %c0_1 = arith.constant 0 : index
    %3 = vector.load %arg3[%c0, %c0_1] : memref<32x128xbf16, #tpu.memory_space<vmem>>, vector<32x128xbf16>
    %c0_2 = arith.constant 0 : index
    %c0_3 = arith.constant 0 : index
    %4 = vector.load %arg4[%c0_2, %c0_3] : memref<1x32xf32, #tpu.memory_space<vmem>>, vector<1x32xf32>
    %c0_4 = arith.constant 0 : index
    %c0_5 = arith.constant 0 : index
    %5 = vector.load %arg6[%c0_4, %c0_5] : memref<2x32xf32, #tpu.memory_space<vmem>>, vector<2x32xf32>
    %c0_i32_6 = arith.constant 0 : i32
    %6 = arith.index_cast %c0_i32_6 : i32 to index
    %c0_7 = arith.constant 0 : index
    %c0_8 = arith.constant 0 : index
    %7 = vector.load %arg2[%6, %c0_7, %c0_8] : memref<8x2x128xbf16, #tpu.memory_space<vmem>>, vector<1x2x128xbf16>
    %8 = vector.shape_cast %7 : vector<1x2x128xbf16> to vector<2x128xbf16>
    %9 = arith.extf %8 : vector<2x128xbf16> to vector<2x128xf32>
    %10 = arith.truncf %5 : vector<2x32xf32> to vector<2x32xbf16>
    %cst = arith.constant dense<0.000000e+00> : vector<2x128xf32>
    %11 = tpu.matmul %10, %3, %cst {dimension_numbers = #tpu.dot_dimension_numbers<[1], [0], [0], [1], [0, 0, 1, 1], [], []>} : vector<2x32xbf16>, vector<32x128xbf16>, vector<2x128xf32> -> vector<2x128xf32>
    %12 = vector.extract_strided_slice %9 {offsets = [0, 0], sizes = [2, 64], strides = [1, 1]} : vector<2x128xf32> to vector<2x64xf32>
    %13 = vector.extract_strided_slice %11 {offsets = [0, 0], sizes = [2, 64], strides = [1, 1]} : vector<2x128xf32> to vector<2x64xf32>
    %14 = arith.addf %12, %13 : vector<2x64xf32>
    %15 = arith.negf %14 : vector<2x64xf32>
    %16 = math.exp %15 : vector<2x64xf32>
    %cst_9 = arith.constant 1.000000e+00 : f32
    %17 = vector.broadcast %cst_9 : f32 to vector<2x64xf32>
    %18 = arith.addf %17, %16 : vector<2x64xf32>
    %19 = arith.divf %17, %18 : vector<2x64xf32>
    %20 = vector.extract_strided_slice %19 {offsets = [0, 0], sizes = [2, 32], strides = [1, 1]} : vector<2x64xf32> to vector<2x32xf32>
    %21 = vector.extract_strided_slice %19 {offsets = [0, 32], sizes = [2, 32], strides = [1, 1]} : vector<2x64xf32> to vector<2x32xf32>
    %22 = vector.extract_strided_slice %9 {offsets = [0, 64], sizes = [2, 32], strides = [1, 1]} : vector<2x128xf32> to vector<2x32xf32>
    %23 = vector.extract_strided_slice %11 {offsets = [0, 64], sizes = [2, 32], strides = [1, 1]} : vector<2x128xf32> to vector<2x32xf32>
    %24 = vector.broadcast %4 : vector<1x32xf32> to vector<2x32xf32>
    %25 = arith.addf %23, %24 : vector<2x32xf32>
    %26 = arith.mulf %20, %25 : vector<2x32xf32>
    %27 = arith.addf %22, %26 : vector<2x32xf32>
    %28 = math.tanh %27 : vector<2x32xf32>
    %29 = arith.subf %5, %28 : vector<2x32xf32>
    %30 = arith.mulf %21, %29 : vector<2x32xf32>
    %31 = arith.addf %28, %30 : vector<2x32xf32>
    %c1_i32 = arith.constant 1 : i32
    %32 = arith.index_cast %c1_i32 : i32 to index
    %c0_10 = arith.constant 0 : index
    %c0_11 = arith.constant 0 : index
    %33 = vector.load %arg2[%32, %c0_10, %c0_11] : memref<8x2x128xbf16, #tpu.memory_space<vmem>>, vector<1x2x128xbf16>
    %34 = vector.shape_cast %33 : vector<1x2x128xbf16> to vector<2x128xbf16>
    %35 = arith.extf %34 : vector<2x128xbf16> to vector<2x128xf32>
    %36 = arith.truncf %31 : vector<2x32xf32> to vector<2x32xbf16>
    %cst_12 = arith.constant dense<0.000000e+00> : vector<2x128xf32>
    %37 = tpu.matmul %36, %3, %cst_12 {dimension_numbers = #tpu.dot_dimension_numbers<[1], [0], [0], [1], [0, 0, 1, 1], [], []>} : vector<2x32xbf16>, vector<32x128xbf16>, vector<2x128xf32> -> vector<2x128xf32>
    %38 = vector.extract_strided_slice %35 {offsets = [0, 0], sizes = [2, 64], strides = [1, 1]} : vector<2x128xf32> to vector<2x64xf32>
    %39 = vector.extract_strided_slice %37 {offsets = [0, 0], sizes = [2, 64], strides = [1, 1]} : vector<2x128xf32> to vector<2x64xf32>
    %40 = arith.addf %38, %39 : vector<2x64xf32>
    %41 = arith.negf %40 : vector<2x64xf32>
    %42 = math.exp %41 : vector<2x64xf32>
    %cst_13 = arith.constant 1.000000e+00 : f32
    %43 = vector.broadcast %cst_13 : f32 to vector<2x64xf32>
    %44 = arith.addf %43, %42 : vector<2x64xf32>
    %45 = arith.divf %43, %44 : vector<2x64xf32>
    %46 = vector.extract_strided_slice %45 {offsets = [0, 0], sizes = [2, 32], strides = [1, 1]} : vector<2x64xf32> to vector<2x32xf32>
    %47 = vector.extract_strided_slice %45 {offsets = [0, 32], sizes = [2, 32], strides = [1, 1]} : vector<2x64xf32> to vector<2x32xf32>
    %48 = vector.extract_strided_slice %35 {offsets = [0, 64], sizes = [2, 32], strides = [1, 1]} : vector<2x128xf32> to vector<2x32xf32>
    %49 = vector.extract_strided_slice %37 {offsets = [0, 64], sizes = [2, 32], strides = [1, 1]} : vector<2x128xf32> to vector<2x32xf32>
    %50 = vector.broadcast %4 : vector<1x32xf32> to vector<2x32xf32>
    %51 = arith.addf %49, %50 : vector<2x32xf32>
    %52 = arith.mulf %46, %51 : vector<2x32xf32>
    %53 = arith.addf %48, %52 : vector<2x32xf32>
    %54 = math.tanh %53 : vector<2x32xf32>
    %55 = arith.subf %31, %54 : vector<2x32xf32>
    %56 = arith.mulf %47, %55 : vector<2x32xf32>
    %57 = arith.addf %54, %56 : vector<2x32xf32>
    %c2_i32 = arith.constant 2 : i32
    %58 = arith.index_cast %c2_i32 : i32 to index
    %c0_14 = arith.constant 0 : index
    %c0_15 = arith.constant 0 : index
    %59 = vector.load %arg2[%58, %c0_14, %c0_15] : memref<8x2x128xbf16, #tpu.memory_space<vmem>>, vector<1x2x128xbf16>
    %60 = vector.shape_cast %59 : vector<1x2x128xbf16> to vector<2x128xbf16>
    %61 = arith.extf %60 : vector<2x128xbf16> to vector<2x128xf32>
    %62 = arith.truncf %57 : vector<2x32xf32> to vector<2x32xbf16>
    %cst_16 = arith.constant dense<0.000000e+00> : vector<2x128xf32>
    %63 = tpu.matmul %62, %3, %cst_16 {dimension_numbers = #tpu.dot_dimension_numbers<[1], [0], [0], [1], [0, 0, 1, 1], [], []>} : vector<2x32xbf16>, vector<32x128xbf16>, vector<2x128xf32> -> vector<2x128xf32>
    %64 = vector.extract_strided_slice %61 {offsets = [0, 0], sizes = [2, 64], strides = [1, 1]} : vector<2x128xf32> to vector<2x64xf32>
    %65 = vector.extract_strided_slice %63 {offsets = [0, 0], sizes = [2, 64], strides = [1, 1]} : vector<2x128xf32> to vector<2x64xf32>
    %66 = arith.addf %64, %65 : vector<2x64xf32>
    %67 = arith.negf %66 : vector<2x64xf32>
    %68 = math.exp %67 : vector<2x64xf32>
    %cst_17 = arith.constant 1.000000e+00 : f32
    %69 = vector.broadcast %cst_17 : f32 to vector<2x64xf32>
    %70 = arith.addf %69, %68 : vector<2x64xf32>
    %71 = arith.divf %69, %70 : vector<2x64xf32>
    %72 = vector.extract_strided_slice %71 {offsets = [0, 0], sizes = [2, 32], strides = [1, 1]} : vector<2x64xf32> to vector<2x32xf32>
    %73 = vector.extract_strided_slice %71 {offsets = [0, 32], sizes = [2, 32], strides = [1, 1]} : vector<2x64xf32> to vector<2x32xf32>
    %74 = vector.extract_strided_slice %61 {offsets = [0, 64], sizes = [2, 32], strides = [1, 1]} : vector<2x128xf32> to vector<2x32xf32>
    %75 = vector.extract_strided_slice %63 {offsets = [0, 64], sizes = [2, 32], strides = [1, 1]} : vector<2x128xf32> to vector<2x32xf32>
    %76 = vector.broadcast %4 : vector<1x32xf32> to vector<2x32xf32>
    %77 = arith.addf %75, %76 : vector<2x32xf32>
    %78 = arith.mulf %72, %77 : vector<2x32xf32>
    %79 = arith.addf %74, %78 : vector<2x32xf32>
    %80 = math.tanh %79 : vector<2x32xf32>
    %81 = arith.subf %57, %80 : vector<2x32xf32>
    %82 = arith.mulf %73, %81 : vector<2x32xf32>
    %83 = arith.addf %80, %82 : vector<2x32xf32>
    %c3_i32 = arith.constant 3 : i32
    %84 = arith.index_cast %c3_i32 : i32 to index
    %c0_18 = arith.constant 0 : index
    %c0_19 = arith.constant 0 : index
    %85 = vector.load %arg2[%84, %c0_18, %c0_19] : memref<8x2x128xbf16, #tpu.memory_space<vmem>>, vector<1x2x128xbf16>
    %86 = vector.shape_cast %85 : vector<1x2x128xbf16> to vector<2x128xbf16>
    %87 = arith.extf %86 : vector<2x128xbf16> to vector<2x128xf32>
    %88 = arith.truncf %83 : vector<2x32xf32> to vector<2x32xbf16>
    %cst_20 = arith.constant dense<0.000000e+00> : vector<2x128xf32>
    %89 = tpu.matmul %88, %3, %cst_20 {dimension_numbers = #tpu.dot_dimension_numbers<[1], [0], [0], [1], [0, 0, 1, 1], [], []>} : vector<2x32xbf16>, vector<32x128xbf16>, vector<2x128xf32> -> vector<2x128xf32>
    %90 = vector.extract_strided_slice %87 {offsets = [0, 0], sizes = [2, 64], strides = [1, 1]} : vector<2x128xf32> to vector<2x64xf32>
    %91 = vector.extract_strided_slice %89 {offsets = [0, 0], sizes = [2, 64], strides = [1, 1]} : vector<2x128xf32> to vector<2x64xf32>
    %92 = arith.addf %90, %91 : vector<2x64xf32>
    %93 = arith.negf %92 : vector<2x64xf32>
    %94 = math.exp %93 : vector<2x64xf32>
    %cst_21 = arith.constant 1.000000e+00 : f32
    %95 = vector.broadcast %cst_21 : f32 to vector<2x64xf32>
    %96 = arith.addf %95, %94 : vector<2x64xf32>
    %97 = arith.divf %95, %96 : vector<2x64xf32>
    %98 = vector.extract_strided_slice %97 {offsets = [0, 0], sizes = [2, 32], strides = [1, 1]} : vector<2x64xf32> to vector<2x32xf32>
    %99 = vector.extract_strided_slice %97 {offsets = [0, 32], sizes = [2, 32], strides = [1, 1]} : vector<2x64xf32> to vector<2x32xf32>
    %100 = vector.extract_strided_slice %87 {offsets = [0, 64], sizes = [2, 32], strides = [1, 1]} : vector<2x128xf32> to vector<2x32xf32>
    %101 = vector.extract_strided_slice %89 {offsets = [0, 64], sizes = [2, 32], strides = [1, 1]} : vector<2x128xf32> to vector<2x32xf32>
    %102 = vector.broadcast %4 : vector<1x32xf32> to vector<2x32xf32>
    %103 = arith.addf %101, %102 : vector<2x32xf32>
    %104 = arith.mulf %98, %103 : vector<2x32xf32>
    %105 = arith.addf %100, %104 : vector<2x32xf32>
    %106 = math.tanh %105 : vector<2x32xf32>
    %107 = arith.subf %83, %106 : vector<2x32xf32>
    %108 = arith.mulf %99, %107 : vector<2x32xf32>
    %109 = arith.addf %106, %108 : vector<2x32xf32>
    %c4_i32 = arith.constant 4 : i32
    %110 = arith.index_cast %c4_i32 : i32 to index
    %c0_22 = arith.constant 0 : index
    %c0_23 = arith.constant 0 : index
    %111 = vector.load %arg2[%110, %c0_22, %c0_23] : memref<8x2x128xbf16, #tpu.memory_space<vmem>>, vector<1x2x128xbf16>
    %112 = vector.shape_cast %111 : vector<1x2x128xbf16> to vector<2x128xbf16>
    %113 = arith.extf %112 : vector<2x128xbf16> to vector<2x128xf32>
    %114 = arith.truncf %109 : vector<2x32xf32> to vector<2x32xbf16>
    %cst_24 = arith.constant dense<0.000000e+00> : vector<2x128xf32>
    %115 = tpu.matmul %114, %3, %cst_24 {dimension_numbers = #tpu.dot_dimension_numbers<[1], [0], [0], [1], [0, 0, 1, 1], [], []>} : vector<2x32xbf16>, vector<32x128xbf16>, vector<2x128xf32> -> vector<2x128xf32>
    %116 = vector.extract_strided_slice %113 {offsets = [0, 0], sizes = [2, 64], strides = [1, 1]} : vector<2x128xf32> to vector<2x64xf32>
    %117 = vector.extract_strided_slice %115 {offsets = [0, 0], sizes = [2, 64], strides = [1, 1]} : vector<2x128xf32> to vector<2x64xf32>
    %118 = arith.addf %116, %117 : vector<2x64xf32>
    %119 = arith.negf %118 : vector<2x64xf32>
    %120 = math.exp %119 : vector<2x64xf32>
    %cst_25 = arith.constant 1.000000e+00 : f32
    %121 = vector.broadcast %cst_25 : f32 to vector<2x64xf32>
    %122 = arith.addf %121, %120 : vector<2x64xf32>
    %123 = arith.divf %121, %122 : vector<2x64xf32>
    %124 = vector.extract_strided_slice %123 {offsets = [0, 0], sizes = [2, 32], strides = [1, 1]} : vector<2x64xf32> to vector<2x32xf32>
    %125 = vector.extract_strided_slice %123 {offsets = [0, 32], sizes = [2, 32], strides = [1, 1]} : vector<2x64xf32> to vector<2x32xf32>
    %126 = vector.extract_strided_slice %113 {offsets = [0, 64], sizes = [2, 32], strides = [1, 1]} : vector<2x128xf32> to vector<2x32xf32>
    %127 = vector.extract_strided_slice %115 {offsets = [0, 64], sizes = [2, 32], strides = [1, 1]} : vector<2x128xf32> to vector<2x32xf32>
    %128 = vector.broadcast %4 : vector<1x32xf32> to vector<2x32xf32>
    %129 = arith.addf %127, %128 : vector<2x32xf32>
    %130 = arith.mulf %124, %129 : vector<2x32xf32>
    %131 = arith.addf %126, %130 : vector<2x32xf32>
    %132 = math.tanh %131 : vector<2x32xf32>
    %133 = arith.subf %109, %132 : vector<2x32xf32>
    %134 = arith.mulf %125, %133 : vector<2x32xf32>
    %135 = arith.addf %132, %134 : vector<2x32xf32>
    %c5_i32 = arith.constant 5 : i32
    %136 = arith.index_cast %c5_i32 : i32 to index
    %c0_26 = arith.constant 0 : index
    %c0_27 = arith.constant 0 : index
    %137 = vector.load %arg2[%136, %c0_26, %c0_27] : memref<8x2x128xbf16, #tpu.memory_space<vmem>>, vector<1x2x128xbf16>
    %138 = vector.shape_cast %137 : vector<1x2x128xbf16> to vector<2x128xbf16>
    %139 = arith.extf %138 : vector<2x128xbf16> to vector<2x128xf32>
    %140 = arith.truncf %135 : vector<2x32xf32> to vector<2x32xbf16>
    %cst_28 = arith.constant dense<0.000000e+00> : vector<2x128xf32>
    %141 = tpu.matmul %140, %3, %cst_28 {dimension_numbers = #tpu.dot_dimension_numbers<[1], [0], [0], [1], [0, 0, 1, 1], [], []>} : vector<2x32xbf16>, vector<32x128xbf16>, vector<2x128xf32> -> vector<2x128xf32>
    %142 = vector.extract_strided_slice %139 {offsets = [0, 0], sizes = [2, 64], strides = [1, 1]} : vector<2x128xf32> to vector<2x64xf32>
    %143 = vector.extract_strided_slice %141 {offsets = [0, 0], sizes = [2, 64], strides = [1, 1]} : vector<2x128xf32> to vector<2x64xf32>
    %144 = arith.addf %142, %143 : vector<2x64xf32>
    %145 = arith.negf %144 : vector<2x64xf32>
    %146 = math.exp %145 : vector<2x64xf32>
    %cst_29 = arith.constant 1.000000e+00 : f32
    %147 = vector.broadcast %cst_29 : f32 to vector<2x64xf32>
    %148 = arith.addf %147, %146 : vector<2x64xf32>
    %149 = arith.divf %147, %148 : vector<2x64xf32>
    %150 = vector.extract_strided_slice %149 {offsets = [0, 0], sizes = [2, 32], strides = [1, 1]} : vector<2x64xf32> to vector<2x32xf32>
    %151 = vector.extract_strided_slice %149 {offsets = [0, 32], sizes = [2, 32], strides = [1, 1]} : vector<2x64xf32> to vector<2x32xf32>
    %152 = vector.extract_strided_slice %139 {offsets = [0, 64], sizes = [2, 32], strides = [1, 1]} : vector<2x128xf32> to vector<2x32xf32>
    %153 = vector.extract_strided_slice %141 {offsets = [0, 64], sizes = [2, 32], strides = [1, 1]} : vector<2x128xf32> to vector<2x32xf32>
    %154 = vector.broadcast %4 : vector<1x32xf32> to vector<2x32xf32>
    %155 = arith.addf %153, %154 : vector<2x32xf32>
    %156 = arith.mulf %150, %155 : vector<2x32xf32>
    %157 = arith.addf %152, %156 : vector<2x32xf32>
    %158 = math.tanh %157 : vector<2x32xf32>
    %159 = arith.subf %135, %158 : vector<2x32xf32>
    %160 = arith.mulf %151, %159 : vector<2x32xf32>
    %161 = arith.addf %158, %160 : vector<2x32xf32>
    %c6_i32 = arith.constant 6 : i32
    %162 = arith.index_cast %c6_i32 : i32 to index
    %c0_30 = arith.constant 0 : index
    %c0_31 = arith.constant 0 : index
    %163 = vector.load %arg2[%162, %c0_30, %c0_31] : memref<8x2x128xbf16, #tpu.memory_space<vmem>>, vector<1x2x128xbf16>
    %164 = vector.shape_cast %163 : vector<1x2x128xbf16> to vector<2x128xbf16>
    %165 = arith.extf %164 : vector<2x128xbf16> to vector<2x128xf32>
    %166 = arith.truncf %161 : vector<2x32xf32> to vector<2x32xbf16>
    %cst_32 = arith.constant dense<0.000000e+00> : vector<2x128xf32>
    %167 = tpu.matmul %166, %3, %cst_32 {dimension_numbers = #tpu.dot_dimension_numbers<[1], [0], [0], [1], [0, 0, 1, 1], [], []>} : vector<2x32xbf16>, vector<32x128xbf16>, vector<2x128xf32> -> vector<2x128xf32>
    %168 = vector.extract_strided_slice %165 {offsets = [0, 0], sizes = [2, 64], strides = [1, 1]} : vector<2x128xf32> to vector<2x64xf32>
    %169 = vector.extract_strided_slice %167 {offsets = [0, 0], sizes = [2, 64], strides = [1, 1]} : vector<2x128xf32> to vector<2x64xf32>
    %170 = arith.addf %168, %169 : vector<2x64xf32>
    %171 = arith.negf %170 : vector<2x64xf32>
    %172 = math.exp %171 : vector<2x64xf32>
    %cst_33 = arith.constant 1.000000e+00 : f32
    %173 = vector.broadcast %cst_33 : f32 to vector<2x64xf32>
    %174 = arith.addf %173, %172 : vector<2x64xf32>
    %175 = arith.divf %173, %174 : vector<2x64xf32>
    %176 = vector.extract_strided_slice %175 {offsets = [0, 0], sizes = [2, 32], strides = [1, 1]} : vector<2x64xf32> to vector<2x32xf32>
    %177 = vector.extract_strided_slice %175 {offsets = [0, 32], sizes = [2, 32], strides = [1, 1]} : vector<2x64xf32> to vector<2x32xf32>
    %178 = vector.extract_strided_slice %165 {offsets = [0, 64], sizes = [2, 32], strides = [1, 1]} : vector<2x128xf32> to vector<2x32xf32>
    %179 = vector.extract_strided_slice %167 {offsets = [0, 64], sizes = [2, 32], strides = [1, 1]} : vector<2x128xf32> to vector<2x32xf32>
    %180 = vector.broadcast %4 : vector<1x32xf32> to vector<2x32xf32>
    %181 = arith.addf %179, %180 : vector<2x32xf32>
    %182 = arith.mulf %176, %181 : vector<2x32xf32>
    %183 = arith.addf %178, %182 : vector<2x32xf32>
    %184 = math.tanh %183 : vector<2x32xf32>
    %185 = arith.subf %161, %184 : vector<2x32xf32>
    %186 = arith.mulf %177, %185 : vector<2x32xf32>
    %187 = arith.addf %184, %186 : vector<2x32xf32>
    %c7_i32 = arith.constant 7 : i32
    %188 = arith.index_cast %c7_i32 : i32 to index
    %c0_34 = arith.constant 0 : index
    %c0_35 = arith.constant 0 : index
    %189 = vector.load %arg2[%188, %c0_34, %c0_35] : memref<8x2x128xbf16, #tpu.memory_space<vmem>>, vector<1x2x128xbf16>
    %190 = vector.shape_cast %189 : vector<1x2x128xbf16> to vector<2x128xbf16>
    %191 = arith.extf %190 : vector<2x128xbf16> to vector<2x128xf32>
    %192 = arith.truncf %187 : vector<2x32xf32> to vector<2x32xbf16>
    %cst_36 = arith.constant dense<0.000000e+00> : vector<2x128xf32>
    %193 = tpu.matmul %192, %3, %cst_36 {dimension_numbers = #tpu.dot_dimension_numbers<[1], [0], [0], [1], [0, 0, 1, 1], [], []>} : vector<2x32xbf16>, vector<32x128xbf16>, vector<2x128xf32> -> vector<2x128xf32>
    %194 = vector.extract_strided_slice %191 {offsets = [0, 0], sizes = [2, 64], strides = [1, 1]} : vector<2x128xf32> to vector<2x64xf32>
    %195 = vector.extract_strided_slice %193 {offsets = [0, 0], sizes = [2, 64], strides = [1, 1]} : vector<2x128xf32> to vector<2x64xf32>
    %196 = arith.addf %194, %195 : vector<2x64xf32>
    %197 = arith.negf %196 : vector<2x64xf32>
    %198 = math.exp %197 : vector<2x64xf32>
    %cst_37 = arith.constant 1.000000e+00 : f32
    %199 = vector.broadcast %cst_37 : f32 to vector<2x64xf32>
    %200 = arith.addf %199, %198 : vector<2x64xf32>
    %201 = arith.divf %199, %200 : vector<2x64xf32>
    %202 = vector.extract_strided_slice %201 {offsets = [0, 0], sizes = [2, 32], strides = [1, 1]} : vector<2x64xf32> to vector<2x32xf32>
    %203 = vector.extract_strided_slice %201 {offsets = [0, 32], sizes = [2, 32], strides = [1, 1]} : vector<2x64xf32> to vector<2x32xf32>
    %204 = vector.extract_strided_slice %191 {offsets = [0, 64], sizes = [2, 32], strides = [1, 1]} : vector<2x128xf32> to vector<2x32xf32>
    %205 = vector.extract_strided_slice %193 {offsets = [0, 64], sizes = [2, 32], strides = [1, 1]} : vector<2x128xf32> to vector<2x32xf32>
    %206 = vector.broadcast %4 : vector<1x32xf32> to vector<2x32xf32>
    %207 = arith.addf %205, %206 : vector<2x32xf32>
    %208 = arith.mulf %202, %207 : vector<2x32xf32>
    %209 = arith.addf %204, %208 : vector<2x32xf32>
    %210 = math.tanh %209 : vector<2x32xf32>
    %211 = arith.subf %187, %210 : vector<2x32xf32>
    %212 = arith.mulf %203, %211 : vector<2x32xf32>
    %213 = arith.addf %210, %212 : vector<2x32xf32>
    %c8_i32 = arith.constant 8 : i32
    %c0_38 = arith.constant 0 : index
    %c0_39 = arith.constant 0 : index
    %214 = vector.load %arg6[%c0_38, %c0_39] : memref<2x32xf32, #tpu.memory_space<vmem>>, vector<2x32xf32>
    tpu.vector_store %arg6[%c0_38, %c0_39], %213 {strides = array<i32>} : memref<2x32xf32, #tpu.memory_space<vmem>>, vector<2x32xf32>,
    %c0_i32_40 = arith.constant 0 : i32
    %215 = arith.cmpi eq, %arg1, %c0_i32_40 : i32
    %216 = arith.extui %215 : i1 to i32
    %c0_i32_41 = arith.constant 0 : i32
    %217 = arith.cmpi ne, %216, %c0_i32_41 : i32
    scf.if %217 {
      %218 = arith.mulf %213, %213 : vector<2x32xf32>
      %cst_42 = arith.constant dense<0.000000e+00> : vector<2xf32>
      %219 = vector.multi_reduction <add>, %218, %cst_42 [1] : vector<2x32xf32> to vector<2xf32>
      %220 = vector.shape_cast %219 : vector<2xf32> to vector<2x1xf32>
      %cst_43 = arith.constant 1.000000e-24 : f32
      %221 = vector.broadcast %cst_43 : f32 to vector<2x1xf32>
      %222 = arith.maximumf %220, %221 : vector<2x1xf32>
      %223 = math.rsqrt %222 : vector<2x1xf32>
      %224 = vector.broadcast %223 : vector<2x1xf32> to vector<2x32xf32>
      %225 = arith.mulf %213, %224 : vector<2x32xf32>
      %c0_44 = arith.constant 0 : index
      %c0_45 = arith.constant 0 : index
      %226 = vector.load %arg5[%c0_44, %c0_45] : memref<2x32xf32, #tpu.memory_space<vmem>>, vector<2x32xf32>
      tpu.vector_store %arg5[%c0_44, %c0_45], %225 {strides = array<i32>} : memref<2x32xf32, #tpu.memory_space<vmem>>, vector<2x32xf32>,
    } else {
    }
    return
  }
  func.func @transform_0(%arg0: i32, %arg1: i32) -> (i32, i32, i32) {
    %c0_i32 = arith.constant 0 : i32
    %c0_i32_0 = arith.constant 0 : i32
    return %arg1, %arg0, %c0_i32 : i32, i32, i32
  }
  func.func @transform_1(%arg0: i32, %arg1: i32) -> (i32, i32) {
    %c0_i32 = arith.constant 0 : i32
    %c0_i32_0 = arith.constant 0 : i32
    %c0_i32_1 = arith.constant 0 : i32
    return %c0_i32, %c0_i32_0 : i32, i32
  }
  func.func @transform_2(%arg0: i32, %arg1: i32) -> (i32, i32) {
    %c0_i32 = arith.constant 0 : i32
    %c0_i32_0 = arith.constant 0 : i32
    %c0_i32_1 = arith.constant 0 : i32
    return %c0_i32, %c0_i32_0 : i32, i32
  }
  func.func @transform_3(%arg0: i32, %arg1: i32) -> (i32, i32) {
    %c0_i32 = arith.constant 0 : i32
    %c0_i32_0 = arith.constant 0 : i32
    return %arg0, %c0_i32 : i32, i32
  }
}

</mosaic_0001>

<llo_original>
// kernel: audio_forward.1
$region0: #{audio_forward.1}
  #allocation0 [shape = 'u32[]', space=smem, size = 0x4, offset = 0x4, fixed_abs, tag = 'smem constant byte address 0x4 - core index']
  #allocation1 [shape = 'u32[72,128]{1,0:T(1,128)}', space=vmem, size = 0x9000, scoped, tag = 'internal scratch']
  #allocation2 [shape = 'f32[2,32]{1,0:T(2,128)}', space=vmem, size = 0x400, scoped, tag = 'scratch operand']
  %s0 = inlined_call_operand.vmem [shape: bf16[8,2,128], index: 0, kind: input, shape index: {}]
  %s1 = inlined_call_operand.vmem [shape: bf16[32,128], index: 1, kind: input, shape index: {}]
  %s2 = inlined_call_operand.vmem [shape: f32[1,32], index: 2, kind: input, shape index: {}]
  %s3 = inlined_call_operand.hbm [shape: f32[2,32], index: 3, kind: output, shape index: {}]
  %s4 = sld [smem:[#allocation0]]
  $region30: #{audio_forward.1} parent=0
    _
  %s6 = ssub.s32 1, %s4
  %s7 = scalar_select 0, %s6, %s4
  $region1: #{audio_forward.1} parent=0
    #allocation3 [shape = 'u8[1024]{0}', space=vmem, size = 0x400, scoped, tag = 'output window, operand 0, single buffered']
    #allocation4 [shape = 's32[1]{0}', space=sflag, size = 0x4, scoped, tag = 'scoped memory for audio_forward.1']
    %8 = vsyncpa [#allocation4], 0
    // Predicated region
    $region2: #{audio_forward.1} parent=1 // pred_check
      _
    $region3: #{audio_forward.1} parent=1 // pred_check_branch
      %10 = sbr.rel (0) target = $region5
    $region4: #{audio_forward.1} parent=1 // pred_region
      _
    $region5: #{audio_forward.1} parent=1 // pred_fallthru
      _
    // Predicated region
    $region6: #{audio_forward.1} parent=1 // pred_check
      _
    $region7: #{audio_forward.1} parent=1 // pred_check_branch
      %12 = sbr.rel (0) target = $region9
    $region8: #{audio_forward.1} parent=1 // pred_region
      _
    $region9: #{audio_forward.1} parent=1 // pred_fallthru
      _
    // Predicated region
    $region10: #{audio_forward.1} parent=1 // pred_check
      _
    $region11: #{audio_forward.1} parent=1 // pred_check_branch
      %14 = sbr.rel (0) target = $region13
    $region12: #{audio_forward.1} parent=1 // pred_region
      _
    $region13: #{audio_forward.1} parent=1 // pred_fallthru
      _
    %p16 = scmp.eq.s32.totalorder 0, 0
    // Predicated region
    $region14: #{audio_forward.1} parent=1 // pred_check
      %p17 = pneg %p16
    $region15: #{audio_forward.1} parent=1 // pred_check_branch
      %19 = sbr.rel (%p17) target = $region17
    $region16: #{audio_forward.1} parent=1 // pred_region
      %vm20 = vcmask 254976
      %21 = vst.msk [vmem:[#allocation2] sm:$0x3] %vm20, 0.0
    $region17: #{audio_forward.1} parent=1 // pred_fallthru
      _
    %v22 = vld [vmem:[%s1] sm:$0xf]
    %v23 = vld [vmem:[%s1 + $0x4] sm:$0xf]
    %v24 = vld [vmem:[%s1 + $0x8] sm:$0xf]
    %v25 = vld [vmem:[%s1 + $0xc] sm:$0xf]
    %v26 = vld [vmem:[%s2] sm:$0x1]
    %v27 = vld [vmem:[#allocation2] sm:$0x3]
    %v28 = vld [vmem:[%s0] sm:$0x1]
    %v29 = vunpack.c.l.bf16 %v28
    %v30 = vpack.c.bf16 %v27, %v27
    %v35 = vunpack.c.l.b16 %v22
    %v36 = vunpack.c.l.b16 %v23
    %v37 = vunpack.c.l.b16 %v24
    %v38 = vunpack.c.l.b16 %v25
    %v39 = vpack.c.b16 %v36, %v35
    %v40 = vpack.c.b16 %v38, %v37
    %vm43 = vcmask 261120
    %v45 = vsel %vm43, %v30, 0
    %47 = vmatpush.bf16.msra.mxu0 0
    %48 = vmatpush.bf16.msra.mxu0 0
    %49 = vmatpush.bf16.msra.mxu0 0
    %50 = vmatpush.bf16.msra.mxu0 0
    %51 = vmatpush.bf16.msra.mxu0 0
    %52 = vmatpush.bf16.msra.mxu0 0
    %53 = vmatpush.bf16.msra.mxu0 %v40
    %54 = vmatpush.bf16.msra.mxu0 %v39
    %55 = vmatmul.bf16.gmra.mxu0 %v45
    %v56 = vpop.f32.mrf.mxu0
    %v57 = vadd.f32 0.0, %v56
    %v58 = vpop.f32.mrf.mxu0
    %59 = vdwg.mxu0
    %v60 = vadd.f32 %v29, %v57
    %v61 = vxor.u32 %v60, 2147483648
    %v62 = vmul.f32 %v61, 1.442695
    %v63 = vpow.pop %v62
    %v64 = vadd.f32 %v63, 1.0
    %v65 = vrcp.pop %v64
    %v66 = vmul.f32 %v64, %v65
    %v67 = vsub.f32 1.0, %v66
    %v68 = vmul.f32 %v65, %v67
    %v69 = vadd.f32 %v65, %v68
    %vm70 = vweird.f32 %v64
    %vm71 = vweird.f32 %v65
    %vm72 = vmor %vm70, %vm71
    %v73 = vsel %vm72, %v65, %v69
    %v74 = vand.u32 2147483647, %v64
    %vm75 = vcmp.eq.f32.partialorder %v74, 8.507059e+37
    %v76 = vand.u32 %v64, 2147483648
    %v77 = vor.u32 1.1754944e-38, %v76
    %v78 = vsel %vm75, %v77, %v73
    %v79 = vmul.f32 1.0, %v78
    %v81 = vperm.slane %v26, 0
    %82 = vrot.lane.b32.xlu0 %v81, 64
    %v83 = vpop.permute.xlu0 %82
    %v85 = vadd.f32 %v57, %v83
    %87 = vrot.lane.b32.xlu0 %v85, 64
    %v88 = vpop.permute.xlu0 %87
    %v90 = vmul.f32 %v79, %v88
    %92 = vrot.lane.b32.xlu0 %v90, 64
    %v93 = vpop.permute.xlu0 %92
    %v95 = vadd.f32 %v29, %v93
    %v96 = vtanh.pop %v95
    %98 = vst [vmem:[#allocation1] ss:$4 sm:$0xff] %v96
    %v99 = vld.sshfl [vmem:[#allocation1] sm:$0xff pattern:$0x73625140]
    %100 = vrot.lane.b32.xlu0 %v99, 64
    %v101 = vpop.permute.xlu0 %100
    %v103 = vsub.f32 %v27, %v101
    %105 = vrot.lane.b32.xlu0 %v103, 32
    %v106 = vpop.permute.xlu0 %105
    %v108 = vmul.f32 %v79, %v106
    %110 = vrot.lane.b32.xlu0 %v108, 32
    %v111 = vpop.permute.xlu0 %110
    %v113 = vadd.f32 %v96, %v111
    %s114 = scalar_lea.vmem %s0, 1
    %v115 = vld [vmem:[%s114] sm:$0x1]
    %v116 = vunpack.c.l.bf16 %v115
    %v117 = vpack.c.bf16 %v113, %v113
    %119 = vrot.lane.b32.xlu0 %v117, 64
    %v120 = vpop.permute.xlu0 %119
    %v122 = vsel %vm43, %v120, 0
    %124 = vmatpush.bf16.msra.mxu0 0
    %125 = vmatpush.bf16.msra.mxu0 0
    %126 = vmatpush.bf16.msra.mxu0 0
    %127 = vmatpush.bf16.msra.mxu0 0
    %128 = vmatpush.bf16.msra.mxu0 0
    %129 = vmatpush.bf16.msra.mxu0 0
    %130 = vmatpush.bf16.msra.mxu0 %v40
    %131 = vmatpush.bf16.msra.mxu0 %v39
    %132 = vmatmul.bf16.gmra.mxu0 %v122
    %v133 = vpop.f32.mrf.mxu0
    %v134 = vadd.f32 0.0, %v133
    %v135 = vpop.f32.mrf.mxu0
    %136 = vdwg.mxu0
    %v137 = vadd.f32 %v116, %v134
    %v138 = vxor.u32 %v137, 2147483648
    %v139 = vmul.f32 %v138, 1.442695
    %v140 = vpow.pop %v139
    %v141 = vadd.f32 %v140, 1.0
    %v142 = vrcp.pop %v141
    %v143 = vmul.f32 %v141, %v142
    %v144 = vsub.f32 1.0, %v143
    %v145 = vmul.f32 %v142, %v144
    %v146 = vadd.f32 %v142, %v145
    %vm147 = vweird.f32 %v141
    %vm148 = vweird.f32 %v142
    %vm149 = vmor %vm147, %vm148
    %v150 = vsel %vm149, %v142, %v146
    %v151 = vand.u32 2147483647, %v141
    %vm152 = vcmp.eq.f32.partialorder %v151, 8.507059e+37
    %v153 = vand.u32 %v141, 2147483648
    %v154 = vor.u32 1.1754944e-38, %v153
    %v155 = vsel %vm152, %v154, %v150
    %v156 = vmul.f32 1.0, %v155
    %v157 = vadd.f32 %v134, %v83
    %159 = vrot.lane.b32.xlu0 %v157, 64
    %v160 = vpop.permute.xlu0 %159
    %v162 = vmul.f32 %v156, %v160
    %164 = vrot.lane.b32.xlu0 %v162, 64
    %v165 = vpop.permute.xlu0 %164
    %v167 = vadd.f32 %v116, %v165
    %v168 = vtanh.pop %v167
    %v169 = vsub.f32 %v113, %v168
    %171 = vrot.lane.b32.xlu0 %v169, 96
    %v172 = vpop.permute.xlu0 %171
    %v174 = vmul.f32 %v156, %v172
    %176 = vrot.lane.b32.xlu0 %v174, 32
    %v177 = vpop.permute.xlu0 %176
    %v179 = vadd.f32 %v168, %v177
    %s180 = scalar_lea.vmem %s0, 2
    %v181 = vld [vmem:[%s180] sm:$0x1]
    %v182 = vunpack.c.l.bf16 %v181
    %v183 = vpack.c.bf16 %v179, %v179
    %185 = vrot.lane.b32.xlu0 %v183, 64
    %v186 = vpop.permute.xlu0 %185
    %v188 = vsel %vm43, %v186, 0
    %190 = vmatpush.bf16.msra.mxu0 0
    %191 = vmatpush.bf16.msra.mxu0 0
    %192 = vmatpush.bf16.msra.mxu0 0
    %193 = vmatpush.bf16.msra.mxu0 0
    %194 = vmatpush.bf16.msra.mxu0 0
    %195 = vmatpush.bf16.msra.mxu0 0
    %196 = vmatpush.bf16.msra.mxu0 %v40
    %197 = vmatpush.bf16.msra.mxu0 %v39
    %198 = vmatmul.bf16.gmra.mxu0 %v188
    %v199 = vpop.f32.mrf.mxu0
    %v200 = vadd.f32 0.0, %v199
    %v201 = vpop.f32.mrf.mxu0
    %202 = vdwg.mxu0
    %v203 = vadd.f32 %v182, %v200
    %v204 = vxor.u32 %v203, 2147483648
    %v205 = vmul.f32 %v204, 1.442695
    %v206 = vpow.pop %v205
    %v207 = vadd.f32 %v206, 1.0
    %v208 = vrcp.pop %v207
    %v209 = vmul.f32 %v207, %v208
    %v210 = vsub.f32 1.0, %v209
    %v211 = vmul.f32 %v208, %v210
    %v212 = vadd.f32 %v208, %v211
    %vm213 = vweird.f32 %v207
    %vm214 = vweird.f32 %v208
    %vm215 = vmor %vm213, %vm214
    %v216 = vsel %vm215, %v208, %v212
    %v217 = vand.u32 2147483647, %v207
    %vm218 = vcmp.eq.f32.partialorder %v217, 8.507059e+37
    %v219 = vand.u32 %v207, 2147483648
    %v220 = vor.u32 1.1754944e-38, %v219
    %v221 = vsel %vm218, %v220, %v216
    %v222 = vmul.f32 1.0, %v221
    %v223 = vadd.f32 %v200, %v83
    %225 = vrot.lane.b32.xlu0 %v223, 64
    %v226 = vpop.permute.xlu0 %225
    %v228 = vmul.f32 %v222, %v226
    %230 = vrot.lane.b32.xlu0 %v228, 64
    %v231 = vpop.permute.xlu0 %230
    %v233 = vadd.f32 %v182, %v231
    %v234 = vtanh.pop %v233
    %v235 = vsub.f32 %v179, %v234
    %237 = vrot.lane.b32.xlu0 %v235, 96
    %v238 = vpop.permute.xlu0 %237
    %v240 = vmul.f32 %v222, %v238
    %242 = vrot.lane.b32.xlu0 %v240, 32
    %v243 = vpop.permute.xlu0 %242
    %v245 = vadd.f32 %v234, %v243
    %s246 = scalar_lea.vmem %s0, 3
    %v247 = vld [vmem:[%s246] sm:$0x1]
    %v248 = vunpack.c.l.bf16 %v247
    %v249 = vpack.c.bf16 %v245, %v245
    %251 = vrot.lane.b32.xlu0 %v249, 64
    %v252 = vpop.permute.xlu0 %251
    %v254 = vsel %vm43, %v252, 0
    %256 = vmatpush.bf16.msra.mxu0 0
    %257 = vmatpush.bf16.msra.mxu0 0
    %258 = vmatpush.bf16.msra.mxu0 0
    %259 = vmatpush.bf16.msra.mxu0 0
    %260 = vmatpush.bf16.msra.mxu0 0
    %261 = vmatpush.bf16.msra.mxu0 0
    %262 = vmatpush.bf16.msra.mxu0 %v40
    %263 = vmatpush.bf16.msra.mxu0 %v39
    %264 = vmatmul.bf16.gmra.mxu0 %v254
    %v265 = vpop.f32.mrf.mxu0
    %v266 = vadd.f32 0.0, %v265
    %v267 = vpop.f32.mrf.mxu0
    %268 = vdwg.mxu0
    %v269 = vadd.f32 %v248, %v266
    %v270 = vxor.u32 %v269, 2147483648
    %v271 = vmul.f32 %v270, 1.442695
    %v272 = vpow.pop %v271
    %v273 = vadd.f32 %v272, 1.0
    %v274 = vrcp.pop %v273
    %v275 = vmul.f32 %v273, %v274
    %v276 = vsub.f32 1.0, %v275
    %v277 = vmul.f32 %v274, %v276
    %v278 = vadd.f32 %v274, %v277
    %vm279 = vweird.f32 %v273
    %vm280 = vweird.f32 %v274
    %vm281 = vmor %vm279, %vm280
    %v282 = vsel %vm281, %v274, %v278
    %v283 = vand.u32 2147483647, %v273
    %vm284 = vcmp.eq.f32.partialorder %v283, 8.507059e+37
    %v285 = vand.u32 %v273, 2147483648
    %v286 = vor.u32 1.1754944e-38, %v285
    %v287 = vsel %vm284, %v286, %v282
    %v288 = vmul.f32 1.0, %v287
    %v289 = vadd.f32 %v266, %v83
    %291 = vrot.lane.b32.xlu0 %v289, 64
    %v292 = vpop.permute.xlu0 %291
    %v294 = vmul.f32 %v288, %v292
    %296 = vrot.lane.b32.xlu0 %v294, 64
    %v297 = vpop.permute.xlu0 %296
    %v299 = vadd.f32 %v248, %v297
    %v300 = vtanh.pop %v299
    %v301 = vsub.f32 %v245, %v300
    %303 = vrot.lane.b32.xlu0 %v301, 96
    %v304 = vpop.permute.xlu0 %303
    %v306 = vmul.f32 %v288, %v304
    %308 = vrot.lane.b32.xlu0 %v306, 32
    %v309 = vpop.permute.xlu0 %308
    %v311 = vadd.f32 %v300, %v309
    %s312 = scalar_lea.vmem %s0, 4
    %v313 = vld [vmem:[%s312] sm:$0x1]
    %v314 = vunpack.c.l.bf16 %v313
    %v315 = vpack.c.bf16 %v311, %v311
    %317 = vrot.lane.b32.xlu0 %v315, 64
    %v318 = vpop.permute.xlu0 %317
    %v320 = vsel %vm43, %v318, 0
    %322 = vmatpush.bf16.msra.mxu0 0
    %323 = vmatpush.bf16.msra.mxu0 0
    %324 = vmatpush.bf16.msra.mxu0 0
    %325 = vmatpush.bf16.msra.mxu0 0
    %326 = vmatpush.bf16.msra.mxu0 0
    %327 = vmatpush.bf16.msra.mxu0 0
    %328 = vmatpush.bf16.msra.mxu0 %v40
    %329 = vmatpush.bf16.msra.mxu0 %v39
    %330 = vmatmul.bf16.gmra.mxu0 %v320
    %v331 = vpop.f32.mrf.mxu0
    %v332 = vadd.f32 0.0, %v331
    %v333 = vpop.f32.mrf.mxu0
    %334 = vdwg.mxu0
    %v335 = vadd.f32 %v314, %v332
    %v336 = vxor.u32 %v335, 2147483648
    %v337 = vmul.f32 %v336, 1.442695
    %v338 = vpow.pop %v337
    %v339 = vadd.f32 %v338, 1.0
    %v340 = vrcp.pop %v339
    %v341 = vmul.f32 %v339, %v340
    %v342 = vsub.f32 1.0, %v341
    %v343 = vmul.f32 %v340, %v342
    %v344 = vadd.f32 %v340, %v343
    %vm345 = vweird.f32 %v339
    %vm346 = vweird.f32 %v340
    %vm347 = vmor %vm345, %vm346
    %v348 = vsel %vm347, %v340, %v344
    %v349 = vand.u32 2147483647, %v339
    %vm350 = vcmp.eq.f32.partialorder %v349, 8.507059e+37
    %v351 = vand.u32 %v339, 2147483648
    %v352 = vor.u32 1.1754944e-38, %v351
    %v353 = vsel %vm350, %v352, %v348
    %v354 = vmul.f32 1.0, %v353
    %v355 = vadd.f32 %v332, %v83
    %357 = vrot.lane.b32.xlu0 %v355, 64
    %v358 = vpop.permute.xlu0 %357
    %v360 = vmul.f32 %v354, %v358
    %362 = vrot.lane.b32.xlu0 %v360, 64
    %v363 = vpop.permute.xlu0 %362
    %v365 = vadd.f32 %v314, %v363
    %v366 = vtanh.pop %v365
    %v367 = vsub.f32 %v311, %v366
    %369 = vrot.lane.b32.xlu0 %v367, 96
    %v370 = vpop.permute.xlu0 %369
    %v372 = vmul.f32 %v354, %v370
    %374 = vrot.lane.b32.xlu0 %v372, 32
    %v375 = vpop.permute.xlu0 %374
    %v377 = vadd.f32 %v366, %v375
    %s378 = scalar_lea.vmem %s0, 5
    %v379 = vld [vmem:[%s378] sm:$0x1]
    %v380 = vunpack.c.l.bf16 %v379
    %v381 = vpack.c.bf16 %v377, %v377
    %383 = vrot.lane.b32.xlu0 %v381, 64
    %v384 = vpop.permute.xlu0 %383
    %v386 = vsel %vm43, %v384, 0
    %388 = vmatpush.bf16.msra.mxu0 0
    %389 = vmatpush.bf16.msra.mxu0 0
    %390 = vmatpush.bf16.msra.mxu0 0
    %391 = vmatpush.bf16.msra.mxu0 0
    %392 = vmatpush.bf16.msra.mxu0 0
    %393 = vmatpush.bf16.msra.mxu0 0
    %394 = vmatpush.bf16.msra.mxu0 %v40
    %395 = vmatpush.bf16.msra.mxu0 %v39
    %396 = vmatmul.bf16.gmra.mxu0 %v386
    %v397 = vpop.f32.mrf.mxu0
    %v398 = vadd.f32 0.0, %v397
    %v399 = vpop.f32.mrf.mxu0
    %400 = vdwg.mxu0
    %v401 = vadd.f32 %v380, %v398
    %v402 = vxor.u32 %v401, 2147483648
    %v403 = vmul.f32 %v402, 1.442695
    %v404 = vpow.pop %v403
    %v405 = vadd.f32 %v404, 1.0
    %v406 = vrcp.pop %v405
    %v407 = vmul.f32 %v405, %v406
    %v408 = vsub.f32 1.0, %v407
    %v409 = vmul.f32 %v406, %v408
    %v410 = vadd.f32 %v406, %v409
    %vm411 = vweird.f32 %v405
    %vm412 = vweird.f32 %v406
    %vm413 = vmor %vm411, %vm412
    %v414 = vsel %vm413, %v406, %v410
    %v415 = vand.u32 2147483647, %v405
    %vm416 = vcmp.eq.f32.partialorder %v415, 8.507059e+37
    %v417 = vand.u32 %v405, 2147483648
    %v418 = vor.u32 1.1754944e-38, %v417
    %v419 = vsel %vm416, %v418, %v414
    %v420 = vmul.f32 1.0, %v419
    %v421 = vadd.f32 %v398, %v83
    %423 = vrot.lane.b32.xlu0 %v421, 64
    %v424 = vpop.permute.xlu0 %423
    %v426 = vmul.f32 %v420, %v424
    %428 = vrot.lane.b32.xlu0 %v426, 64
    %v429 = vpop.permute.xlu0 %428
    %v431 = vadd.f32 %v380, %v429
    %v432 = vtanh.pop %v431
    %v433 = vsub.f32 %v377, %v432
    %435 = vrot.lane.b32.xlu0 %v433, 96
    %v436 = vpop.permute.xlu0 %435
    %v438 = vmul.f32 %v420, %v436
    %440 = vrot.lane.b32.xlu0 %v438, 32
    %v441 = vpop.permute.xlu0 %440
    %v443 = vadd.f32 %v432, %v441
    %s444 = scalar_lea.vmem %s0, 6
    %v445 = vld [vmem:[%s444] sm:$0x1]
    %v446 = vunpack.c.l.bf16 %v445
    %v447 = vpack.c.bf16 %v443, %v443
    %449 = vrot.lane.b32.xlu0 %v447, 64
    %v450 = vpop.permute.xlu0 %449
    %v452 = vsel %vm43, %v450, 0
    %454 = vmatpush.bf16.msra.mxu0 0
    %455 = vmatpush.bf16.msra.mxu0 0
    %456 = vmatpush.bf16.msra.mxu0 0
    %457 = vmatpush.bf16.msra.mxu0 0
    %458 = vmatpush.bf16.msra.mxu0 0
    %459 = vmatpush.bf16.msra.mxu0 0
    %460 = vmatpush.bf16.msra.mxu0 %v40
    %461 = vmatpush.bf16.msra.mxu0 %v39
    %462 = vmatmul.bf16.gmra.mxu0 %v452
    %v463 = vpop.f32.mrf.mxu0
    %v464 = vadd.f32 0.0, %v463
    %v465 = vpop.f32.mrf.mxu0
    %466 = vdwg.mxu0
    %v467 = vadd.f32 %v446, %v464
    %v468 = vxor.u32 %v467, 2147483648
    %v469 = vmul.f32 %v468, 1.442695
    %v470 = vpow.pop %v469
    %v471 = vadd.f32 %v470, 1.0
    %v472 = vrcp.pop %v471
    %v473 = vmul.f32 %v471, %v472
    %v474 = vsub.f32 1.0, %v473
    %v475 = vmul.f32 %v472, %v474
    %v476 = vadd.f32 %v472, %v475
    %vm477 = vweird.f32 %v471
    %vm478 = vweird.f32 %v472
    %vm479 = vmor %vm477, %vm478
    %v480 = vsel %vm479, %v472, %v476
    %v481 = vand.u32 2147483647, %v471
    %vm482 = vcmp.eq.f32.partialorder %v481, 8.507059e+37
    %v483 = vand.u32 %v471, 2147483648
    %v484 = vor.u32 1.1754944e-38, %v483
    %v485 = vsel %vm482, %v484, %v480
    %v486 = vmul.f32 1.0, %v485
    %v487 = vadd.f32 %v464, %v83
    %489 = vrot.lane.b32.xlu0 %v487, 64
    %v490 = vpop.permute.xlu0 %489
    %v492 = vmul.f32 %v486, %v490
    %494 = vrot.lane.b32.xlu0 %v492, 64
    %v495 = vpop.permute.xlu0 %494
    %v497 = vadd.f32 %v446, %v495
    %v498 = vtanh.pop %v497
    %v499 = vsub.f32 %v443, %v498
    %501 = vrot.lane.b32.xlu0 %v499, 96
    %v502 = vpop.permute.xlu0 %501
    %v504 = vmul.f32 %v486, %v502
    %506 = vrot.lane.b32.xlu0 %v504, 32
    %v507 = vpop.permute.xlu0 %506
    %v509 = vadd.f32 %v498, %v507
    %s510 = scalar_lea.vmem %s0, 7
    %v511 = vld [vmem:[%s510] sm:$0x1]
    %v512 = vunpack.c.l.bf16 %v511
    %v513 = vpack.c.bf16 %v509, %v509
    %515 = vrot.lane.b32.xlu0 %v513, 64
    %v516 = vpop.permute.xlu0 %515
    %v518 = vsel %vm43, %v516, 0
    %520 = vmatpush.bf16.msra.mxu0 0
    %521 = vmatpush.bf16.msra.mxu0 0
    %522 = vmatpush.bf16.msra.mxu0 0
    %523 = vmatpush.bf16.msra.mxu0 0
    %524 = vmatpush.bf16.msra.mxu0 0
    %525 = vmatpush.bf16.msra.mxu0 0
    %526 = vmatpush.bf16.msra.mxu0 %v40
    %527 = vmatpush.bf16.msra.mxu0 %v39
    %528 = vmatmul.bf16.gmra.mxu0 %v518
    %v529 = vpop.f32.mrf.mxu0
    %v530 = vadd.f32 0.0, %v529
    %v531 = vpop.f32.mrf.mxu0
    %532 = vdwg.mxu0
    %v533 = vadd.f32 %v512, %v530
    %v534 = vxor.u32 %v533, 2147483648
    %v535 = vmul.f32 %v534, 1.442695
    %v536 = vpow.pop %v535
    %v537 = vadd.f32 %v536, 1.0
    %v538 = vrcp.pop %v537
    %v539 = vmul.f32 %v537, %v538
    %v540 = vsub.f32 1.0, %v539
    %v541 = vmul.f32 %v538, %v540
    %v542 = vadd.f32 %v538, %v541
    %vm543 = vweird.f32 %v537
    %vm544 = vweird.f32 %v538
    %vm545 = vmor %vm543, %vm544
    %v546 = vsel %vm545, %v538, %v542
    %v547 = vand.u32 2147483647, %v537
    %vm548 = vcmp.eq.f32.partialorder %v547, 8.507059e+37
    %v549 = vand.u32 %v537, 2147483648
    %v550 = vor.u32 1.1754944e-38, %v549
    %v551 = vsel %vm548, %v550, %v546
    %v552 = vmul.f32 1.0, %v551
    %v553 = vadd.f32 %v530, %v83
    %555 = vrot.lane.b32.xlu0 %v553, 64
    %v556 = vpop.permute.xlu0 %555
    %v558 = vmul.f32 %v552, %v556
    %560 = vrot.lane.b32.xlu0 %v558, 64
    %v561 = vpop.permute.xlu0 %560
    %v563 = vadd.f32 %v512, %v561
    %v564 = vtanh.pop %v563
    %v565 = vsub.f32 %v509, %v564
    %567 = vrot.lane.b32.xlu0 %v565, 96
    %v568 = vpop.permute.xlu0 %567
    %v570 = vmul.f32 %v552, %v568
    %572 = vrot.lane.b32.xlu0 %v570, 32
    %v573 = vpop.permute.xlu0 %572
    %v575 = vadd.f32 %v564, %v573
    %577 = vst [vmem:[#allocation1] ss:$4 sm:$0xff] %v575
    %v578 = vld.sshfl [vmem:[#allocation1] sm:$0xff pattern:$0x73625140]
    %579 = vrot.lane.b32.xlu0 %v578, 64
    %v580 = vpop.permute.xlu0 %579
    %vm582 = vcmask 254976
    %583 = vst.msk [vmem:[#allocation2] sm:$0x3] %vm582, %v580
    // Predicated region
    $region18: #{audio_forward.1} parent=1 // pred_check
      %p584 = pneg %p16
    $region19: #{audio_forward.1} parent=1 // pred_check_branch
      %586 = sbr.rel (%p584) target = $region21
    $region20: #{audio_forward.1} parent=1 // pred_region
      %v587 = vmul.f32 %v575, %v575
      %589 = vst [vmem:[#allocation1] ss:$4 sm:$0xff] %v587
      %v590 = vld.sshfl [vmem:[#allocation1] sm:$0xff pattern:$0x73625140]
      %591 = vrot.lane.b32.xlu0 %v590, 64
      %v592 = vpop.permute.xlu0 %591
      %v594 = vsel %vm582, %v592, 0.0
      %595 = vadd.xlane.f32.xlu0 %v594
      %v596 = vpop.xlane.xlu0 %595
      %v597 = vmax.f32 %v596, 1e-24
      %v598 = vrsqrt.pop %v597
      %v599 = vmul.f32 %v598, %v597
      %v600 = vmul.f32 %v599, %v598
      %v601 = vmul.f32 0.5, %v600
      %v602 = vsub.f32 1.5, %v601
      %v603 = vmul.f32 %v598, %v602
      %vm604 = vweird.f32 %v597
      %vm605 = vweird.f32 %v598
      %vm606 = vmor %vm604, %vm605
      %v607 = vsel %vm606, %v598, %v603
      %v608 = vmul.f32 %v575, %v607
      %610 = vst [vmem:[#allocation1] ss:$4 sm:$0xff] %v608
      %v611 = vld.sshfl [vmem:[#allocation1] sm:$0xff pattern:$0x73625140]
      %612 = vrot.lane.b32.xlu0 %v611, 64
      %v613 = vpop.permute.xlu0 %612
      %615 = vst.msk [vmem:[#allocation3] sm:$0x3] %vm582, %v613
    $region21: #{audio_forward.1} parent=1 // pred_fallthru
      _
    // Predicated region
    $region22: #{audio_forward.1} parent=1 // pred_check
      _
    $region23: #{audio_forward.1} parent=1 // pred_check_branch
      %617 = sbr.rel (0) target = $region25
    $region24: #{audio_forward.1} parent=1 // pred_region
      %619 = vsyncadd [#allocation4], 0
      %s621 = sshll.u32 [#allocation3], 4
      %s622 = int_to_ptr.vmem [resolvable:$true] %s621
      %s623 = sshll.u32 %s3, 4
      %s624 = int_to_ptr.hbm [resolvable:$true] %s623
      %626 = dma.vmem_to_hbm [thread:$0]  %s622, 32, %s624, [#allocation4]
    $region25: #{audio_forward.1} parent=1 // pred_fallthru
      _
    // Predicated region
    $region26: #{audio_forward.1} parent=1 // pred_check
      _
    $region27: #{audio_forward.1} parent=1 // pred_check_branch
      %628 = sbr.rel (0) target = $region29
    $region28: #{audio_forward.1} parent=1 // pred_region
      %630 = dma.done [#allocation4], 32
    $region29: #{audio_forward.1} parent=1 // pred_fallthru
      _
    %631 = vsyncpa [#allocation4], 1

</llo_original>
